<compile_context>
chip_gen: v7x
topology: tpu7x:2x2x1
jax: 0.10.0
libtpu: 0.0.40
codegen_flags: <defaults>
</compile_context>

<pallas_src>
import functools

import jax
import jax.numpy as jnp
from jax.experimental import pallas as pl
from jax.experimental.pallas import tpu as pltpu


def _distill_kl_kernel(y_s_ref, y_t_ref, out_ref, *, inv_T, n_rows, block_rows):
    # (TN, C) tiles, upcast to f32 for numerics (mandatory on v5e anyway).
    s = y_s_ref[...].astype(jnp.float32)
    t = y_t_ref[...].astype(jnp.float32)

    # Row-wise (lane-axis) max; fold 1/T into the shifted values so the raw
    # scaled copies s/T, t/T are never materialized as separate (TN,C) temps.
    s_shift = (s - jnp.max(s, axis=1, keepdims=True)) * inv_T
    t_shift = (t - jnp.max(t, axis=1, keepdims=True)) * inv_T
    d = t_shift - s_shift                                   # single difference

    # NOTE(v7x/bf16): both exps run in f32; see header comment re: EUP slot.
    t_exp = jnp.exp(t_shift)
    s_sum = jnp.sum(jnp.exp(s_shift), axis=1, keepdims=True)   # (TN, 1)
    t_sum = jnp.sum(t_exp, axis=1, keepdims=True)              # (TN, 1)
    cross = jnp.sum(t_exp * d, axis=1, keepdims=True)          # (TN, 1)

    # KL(p_t || p_s) per row; exact divide + single log (per-row scalars only).
    kl_row = cross / t_sum + jnp.log(s_sum / t_sum)            # (TN, 1)

    # Mask rows past the true batch size BEFORE the cross-row tile reduction.
    row = (pl.program_id(0) * block_rows
           + jax.lax.broadcasted_iota(jnp.int32, kl_row.shape, 0))
    kl_masked = jnp.where(row < n_rows, kl_row, 0.0)

    # One partial sum per grid step, written as a lane-dense (1,1,128) block
    # (all lanes carry the same value; the wrapper reads lane 0).
    partial = jnp.sum(kl_masked, axis=0, keepdims=True)        # (1, 1)
    out_ref[...] = jnp.broadcast_to(partial.reshape(1, 1, 1), (1, 1, 128))


def _vmem_budget_and_limit():
    """(pipeline budget, vmem_limit_bytes) chosen per TPU generation."""
    try:
        cap = int(pltpu.get_tpu_info().vmem_capacity_bytes)
    except Exception:  # no TPU info available -> be conservative (v7x-safe)
        cap = 64 * 1024 * 1024
    if cap >= 128 * 1024 * 1024:          # v5e / v6e: 128 MiB physical VMEM
        return 80 * 1024 * 1024, 100 * 1024 * 1024
    return 24 * 1024 * 1024, 48 * 1024 * 1024   # v7x: 64 MiB physical VMEM


def _pick_block_rows(N, C, itemsize, budget):
    """Biggest row tile that keeps 2 inputs x 2 pipeline buffers in budget,
    while keeping the grid at >=2 (ideally >=4) steps when N allows it."""
    align = 8 if itemsize >= 4 else 16          # sublane multiple (f32 / bf16)
    tn = min(max(N, align), 512)                # >=512 rows already ~85% roofline
    while tn > align and 4 * tn * C * itemsize > budget:
        tn //= 2
    tn = max(align, (tn // align) * align)
    if N >= 2 * align:
        # Avoid a 1-step grid: no DMA/compute overlap and no megacore sharding.
        target_steps = 4 if N >= 4 * align else 2
        per_step = -(-N // target_steps)
        cap = max(align, (-(-per_step // align)) * align)
        tn = min(tn, cap)
    return tn


def distill_kl(y_s, y_t, T, *, block_rows=None):
    """Pallas implementation of DistillKL.forward. Returns a scalar f32."""
    assert y_s.shape == y_t.shape and y_s.ndim == 2
    N, C = y_s.shape
    s_item = jnp.dtype(y_s.dtype).itemsize
    t_item = jnp.dtype(y_t.dtype).itemsize
    itemsize = max(s_item, t_item)

    budget, vmem_limit = _vmem_budget_and_limit()
    tn = int(block_rows) if block_rows is not None else _pick_block_rows(
        N, C, itemsize, budget)

    # Even the minimum row tile must fit the pipeline; otherwise we would
    # silently overflow VMEM for vocabulary-scale C.
    # TODO(synk): add a class-axis (C) chunked path with online max/sum for
    # the huge-C case instead of erroring out.
    if 4 * tn * C * itemsize > vmem_limit:
        raise ValueError(
            f"DistillKL tile ({tn}, {C}) x 2 inputs x 2 pipeline buffers "
            f"exceeds the VMEM limit ({vmem_limit} bytes); class-axis tiling "
            f"is not implemented.")

    grid_n = pl.cdiv(N, tn)
    kernel = functools.partial(
        _distill_kl_kernel, inv_T=1.0 / float(T), n_rows=N, block_rows=tn)

    cost = pl.CostEstimate(
        flops=6 * N * C,
        transcendentals=2 * N * C,
        bytes_accessed=N * C * (s_item + t_item) + grid_n * 128 * 4,
    )

    per_tile = pl.pallas_call(
        kernel,
        out_shape=jax.ShapeDtypeStruct((grid_n, 1, 128), jnp.float32),
        grid=(grid_n,),
        in_specs=[
            pl.BlockSpec((tn, C), lambda i: (i, 0)),
            pl.BlockSpec((tn, C), lambda i: (i, 0)),
        ],
        out_specs=pl.BlockSpec((1, 1, 128), lambda i: (i, 0, 0)),
        compiler_params=pltpu.CompilerParams(
            # Disjoint output blocks per grid step -> safe to shard the batch
            # axis across both TensorCores on v7x; no-op on v5e/v6e.
            dimension_semantics=("parallel",),
            vmem_limit_bytes=vmem_limit,
        ),
        cost_estimate=cost,
    )(y_s, y_t)

    # Final batchmean reduction over `grid_n` partial sums in plain XLA.
    return jnp.sum(per_tile[:, 0, 0]) * (float(T) * float(T)) / N


def distill_kl_ref(y_s, y_t, T):
    """Pure-JAX reference for sanity checking."""
    log_p_s = jax.nn.log_softmax(y_s.astype(jnp.float32) / T, axis=1)
    p_t = jax.nn.softmax(y_t.astype(jnp.float32) / T, axis=1)
    log_p_t = jax.nn.log_softmax(y_t.astype(jnp.float32) / T, axis=1)
    return jnp.sum(p_t * (log_p_t - log_p_s)) / y_s.shape[0] * T * T


if __name__ == "__main__":
    T = 4.0
    key = jax.random.PRNGKey(0)
    k1, k2, k3, k4 = jax.random.split(key, 4)

    # Case 1: small single-tile run (batch=8 logits over 128 classes).
    y_s = jax.random.normal(k1, (8, 128), dtype=jnp.float32)
    y_t = jax.random.normal(k2, (8, 128), dtype=jnp.float32)
    loss = jax.block_until_ready(distill_kl(y_s, y_t, T))
    ref = jax.block_until_ready(distill_kl_ref(y_s, y_t, T))
    assert jnp.allclose(loss, ref, rtol=1e-5, atol=1e-5), (loss, ref)

    # Case 2: multi-step grid with a ragged (masked) last tile.
    y_s2 = jax.random.normal(k3, (20, 256), dtype=jnp.float32)
    y_t2 = jax.random.normal(k4, (20, 256), dtype=jnp.float32)
    loss2 = jax.block_until_ready(distill_kl(y_s2, y_t2, T, block_rows=8))
    ref2 = jax.block_until_ready(distill_kl_ref(y_s2, y_t2, T))
    assert jnp.allclose(loss2, ref2, rtol=1e-5, atol=1e-5), (loss2, ref2)

    print("KERNEL_OK")
</pallas_src>

<mosaic_0001>
module attributes {stable_mosaic.version = 11 : i64} {
  func.func @_distill_kl_kernel(%arg0: i32, %arg1: memref<8x128xf32, #tpu.memory_space<vmem>>, %arg2: memref<8x128xf32, #tpu.memory_space<vmem>>, %arg3: memref<1x1x128xf32, #tpu.memory_space<vmem>>) attributes {dimension_semantics = [#tpu.dimension_semantics<parallel>], iteration_bounds = array<i64: 1>, scalar_prefetch = 0 : i64, scratch_operands = 0 : i64, tpu.core_type = #tpu.core_type<tc>, window_params = [{transform_indices = @transform_0, window_bounds = array<i64: 8, 128>}, {transform_indices = @transform_1, window_bounds = array<i64: 8, 128>}, {transform_indices = @transform_2, window_bounds = array<i64: 1, 1, 128>}]} {
    %c0 = arith.constant 0 : index
    %c0_0 = arith.constant 0 : index
    %0 = vector.load %arg1[%c0, %c0_0] : memref<8x128xf32, #tpu.memory_space<vmem>>, vector<8x128xf32>
    %c0_1 = arith.constant 0 : index
    %c0_2 = arith.constant 0 : index
    %1 = vector.load %arg2[%c0_1, %c0_2] : memref<8x128xf32, #tpu.memory_space<vmem>>, vector<8x128xf32>
    %cst = arith.constant dense<0xFF800000> : vector<8xf32>
    %2 = vector.multi_reduction <maximumf>, %0, %cst [1] : vector<8x128xf32> to vector<8xf32>
    %3 = vector.shape_cast %2 : vector<8xf32> to vector<8x1xf32>
    %4 = vector.broadcast %3 : vector<8x1xf32> to vector<8x128xf32>
    %5 = arith.subf %0, %4 : vector<8x128xf32>
    %cst_3 = arith.constant 2.500000e-01 : f32
    %6 = vector.broadcast %cst_3 : f32 to vector<8x128xf32>
    %7 = arith.mulf %5, %6 : vector<8x128xf32>
    %cst_4 = arith.constant dense<0xFF800000> : vector<8xf32>
    %8 = vector.multi_reduction <maximumf>, %1, %cst_4 [1] : vector<8x128xf32> to vector<8xf32>
    %9 = vector.shape_cast %8 : vector<8xf32> to vector<8x1xf32>
    %10 = vector.broadcast %9 : vector<8x1xf32> to vector<8x128xf32>
    %11 = arith.subf %1, %10 : vector<8x128xf32>
    %cst_5 = arith.constant 2.500000e-01 : f32
    %12 = vector.broadcast %cst_5 : f32 to vector<8x128xf32>
    %13 = arith.mulf %11, %12 : vector<8x128xf32>
    %14 = arith.subf %13, %7 : vector<8x128xf32>
    %15 = math.exp %13 : vector<8x128xf32>
    %16 = math.exp %7 : vector<8x128xf32>
    %cst_6 = arith.constant dense<0.000000e+00> : vector<8xf32>
    %17 = vector.multi_reduction <add>, %16, %cst_6 [1] : vector<8x128xf32> to vector<8xf32>
    %18 = vector.shape_cast %17 : vector<8xf32> to vector<8x1xf32>
    %cst_7 = arith.constant dense<0.000000e+00> : vector<8xf32>
    %19 = vector.multi_reduction <add>, %15, %cst_7 [1] : vector<8x128xf32> to vector<8xf32>
    %20 = vector.shape_cast %19 : vector<8xf32> to vector<8x1xf32>
    %21 = arith.mulf %15, %14 : vector<8x128xf32>
    %cst_8 = arith.constant dense<0.000000e+00> : vector<8xf32>
    %22 = vector.multi_reduction <add>, %21, %cst_8 [1] : vector<8x128xf32> to vector<8xf32>
    %23 = vector.shape_cast %22 : vector<8xf32> to vector<8x1xf32>
    %24 = arith.divf %23, %20 : vector<8x1xf32>
    %25 = arith.divf %18, %20 : vector<8x1xf32>
    %26 = math.log %25 : vector<8x1xf32>
    %27 = arith.addf %24, %26 : vector<8x1xf32>
    %c8_i32 = arith.constant 8 : i32
    %28 = arith.muli %arg0, %c8_i32 : i32
    %29 = tpu.iota {dimensions = array<i32: 0>} : vector<8x1xi32>
    %30 = vector.broadcast %28 : i32 to vector<8x1xi32>
    %31 = arith.addi %30, %29 : vector<8x1xi32>
    %c8_i32_9 = arith.constant 8 : i32
    %32 = vector.broadcast %c8_i32_9 : i32 to vector<8x1xi32>
    %33 = arith.cmpi slt, %31, %32 : vector<8x1xi32>
    %cst_10 = arith.constant 0.000000e+00 : f32
    %34 = vector.broadcast %cst_10 : f32 to vector<8x1xf32>
    %35 = arith.select %33, %27, %34 : vector<8x1xi1>, vector<8x1xf32>
    %cst_11 = arith.constant dense<0.000000e+00> : vector<1xf32>
    %36 = vector.multi_reduction <add>, %35, %cst_11 [0] : vector<8x1xf32> to vector<1xf32>
    %37 = vector.shape_cast %36 : vector<1xf32> to vector<1x1xf32>
    %38 = vector.shape_cast %37 : vector<1x1xf32> to vector<1x1x1xf32>
    %39 = vector.shape_cast %38 : vector<1x1x1xf32> to vector<1x1x1xf32>
    %40 = vector.broadcast %39 : vector<1x1x1xf32> to vector<1x1x128xf32>
    %c0_12 = arith.constant 0 : index
    %c0_13 = arith.constant 0 : index
    %c0_14 = arith.constant 0 : index
    %41 = vector.load %arg3[%c0_12, %c0_13, %c0_14] : memref<1x1x128xf32, #tpu.memory_space<vmem>>, vector<1x1x128xf32>
    tpu.vector_store %arg3[%c0_12, %c0_13, %c0_14], %40 {strides = array<i32>} : memref<1x1x128xf32, #tpu.memory_space<vmem>>, vector<1x1x128xf32>,
    return
  }
  func.func @transform_0(%arg0: i32) -> (i32, i32) {
    %c0_i32 = arith.constant 0 : i32
    %c0_i32_0 = arith.constant 0 : i32
    return %arg0, %c0_i32 : i32, i32
  }
  func.func @transform_1(%arg0: i32) -> (i32, i32) {
    %c0_i32 = arith.constant 0 : i32
    %c0_i32_0 = arith.constant 0 : i32
    return %arg0, %c0_i32 : i32, i32
  }
  func.func @transform_2(%arg0: i32) -> (i32, i32, i32) {
    %c0_i32 = arith.constant 0 : i32
    %c0_i32_0 = arith.constant 0 : i32
    %c0_i32_1 = arith.constant 0 : i32
    return %arg0, %c0_i32, %c0_i32_0 : i32, i32, i32
  }
}

</mosaic_0001>

<llo_original>
// kernel: tpu_custom_call.1
$region0: #{tpu_custom_call.1}
  #allocation0 [shape = 'u32[]', space=smem, size = 0x4, offset = 0x4, fixed_abs, tag = 'smem constant byte address 0x4 - core index']
  #allocation1 [shape = 'u32[144,128]{1,0:T(1,128)}', space=vmem, size = 0x12000, scoped, tag = 'internal scratch']
  %s0 = inlined_call_operand.hbm [shape: f32[8,128], index: 0, kind: input, shape index: {}]
  %s1 = inlined_call_operand.hbm [shape: f32[8,128], index: 1, kind: input, shape index: {}]
  %s2 = inlined_call_operand.hbm [shape: f32[1,1,128], index: 2, kind: output, shape index: {}]
  %s3 = sld [smem:[#allocation0]]
  $region26: #{tpu_custom_call.1} parent=0
    _
  %s5 = ssub.s32 1, %s3
  %s6 = scalar_select 0, %s5, %s3
  $region1: #{tpu_custom_call.1} parent=0
    #allocation2 [shape = 'u8[4096]{0}', space=vmem, size = 0x1000, scoped, tag = 'input window, operand 0, single buffered']
    #allocation3 [shape = 's32[1]{0}', space=sflag, size = 0x4, scoped, tag = 'scoped memory for tpu_custom_call.1']
    #allocation4 [shape = 's32[1]{0}', space=sflag, size = 0x4, scoped, tag = 'scoped memory for tpu_custom_call.1']
    #allocation5 [shape = 'u8[4096]{0}', space=vmem, size = 0x1000, scoped, tag = 'input window, operand 1, single buffered']
    #allocation6 [shape = 's32[1]{0}', space=sflag, size = 0x4, scoped, tag = 'scoped memory for tpu_custom_call.1']
    #allocation7 [shape = 'u8[512]{0}', space=vmem, size = 0x400, scoped, tag = 'output window, operand 0, single buffered']
    %7 = vsyncpa [#allocation3], 0
    %8 = vsyncpa [#allocation6], 0
    %9 = vsyncpa [#allocation4], 0
    // Predicated region
    $region2: #{tpu_custom_call.1} parent=1 // pred_check
      _
    $region3: #{tpu_custom_call.1} parent=1 // pred_check_branch
      %11 = sbr.rel (0) target = $region5
    $region4: #{tpu_custom_call.1} parent=1 // pred_region
      %s13 = ssub.s32 128, 128
      %14 = vsyncadd [#allocation3], %s13
      %s16 = sshll.u32 [#allocation2], 4
      %s17 = int_to_ptr.vmem [resolvable:$true] %s16
      %19 = dma.hbm_to_vmem [thread:$0]  %s0, 128, %s17, [#allocation3]
    $region5: #{tpu_custom_call.1} parent=1 // pred_fallthru
      _
    // Predicated region
    $region6: #{tpu_custom_call.1} parent=1 // pred_check
      _
    $region7: #{tpu_custom_call.1} parent=1 // pred_check_branch
      %21 = sbr.rel (0) target = $region9
    $region8: #{tpu_custom_call.1} parent=1 // pred_region
      %s23 = ssub.s32 128, 128
      %24 = vsyncadd [#allocation6], %s23
      %s26 = sshll.u32 [#allocation5], 4
      %s27 = int_to_ptr.vmem [resolvable:$true] %s26
      %29 = dma.hbm_to_vmem [thread:$0]  %s1, 128, %s27, [#allocation6]
    $region9: #{tpu_custom_call.1} parent=1 // pred_fallthru
      _
    // Predicated region
    $region10: #{tpu_custom_call.1} parent=1 // pred_check
      _
    $region11: #{tpu_custom_call.1} parent=1 // pred_check_branch
      %31 = sbr.rel (0) target = $region13
    $region12: #{tpu_custom_call.1} parent=1 // pred_region
      %32 = dma.done [#allocation3], 128
    $region13: #{tpu_custom_call.1} parent=1 // pred_fallthru
      _
    // Predicated region
    $region14: #{tpu_custom_call.1} parent=1 // pred_check
      _
    $region15: #{tpu_custom_call.1} parent=1 // pred_check_branch
      %34 = sbr.rel (0) target = $region17
    $region16: #{tpu_custom_call.1} parent=1 // pred_region
      %35 = dma.done [#allocation6], 128
    $region17: #{tpu_custom_call.1} parent=1 // pred_fallthru
      _
    %v36 = vld [vmem:[#allocation2] sm:$0xff]
    %v37 = vld [vmem:[#allocation5] sm:$0xff]
    %38 = vmax.xlane.f32.xlu0 %v36
    %v39 = vpop.xlane.xlu0 %38
    %v40 = vsub.f32 %v36, %v39
    %v41 = vmul.f32 %v40, 0.25
    %42 = vmax.xlane.f32.xlu0 %v37
    %v43 = vpop.xlane.xlu0 %42
    %v44 = vsub.f32 %v37, %v43
    %v45 = vmul.f32 %v44, 0.25
    %v46 = vsub.f32 %v45, %v41
    %v47 = vmul.f32 %v45, 1.442695
    %v48 = vpow.pop %v47
    %v49 = vmul.f32 %v41, 1.442695
    %v50 = vpow.pop %v49
    %51 = vadd.xlane.f32.xlu0 %v50
    %v52 = vpop.xlane.xlu0 %51
    %53 = vadd.xlane.f32.xlu0 %v48
    %v54 = vpop.xlane.xlu0 %53
    %v55 = vmul.f32 %v48, %v46
    %56 = vadd.xlane.f32.xlu0 %v55
    %v57 = vpop.xlane.xlu0 %56
    %v58 = vrcp.pop %v54
    %v59 = vmul.f32 %v57, %v58
    %v60 = vmul.f32 %v52, %v58
    %v61 = vlog2.pop %v60
    %v62 = vmul.f32 %v61, 0.6931472
    %v63 = vadd.f32 %v59, %v62
    %s64 = smul.u32 0, 8
    %v65 = vlaneseq
    %v66 = vshrl.u32 %v65, 7
    %v67 = vstv %s64
    %v68 = vadd.s32 %v67, %v66
    %vm69 = vcmp.lt.s32.totalorder %v68, 8
    %v70 = vsel %vm69, %v63, 0.0
    %v71 = vrot.slane %v70, 4
    %v72 = vadd.f32 %v70, %v71
    %v73 = vrot.slane %v72, 2
    %v74 = vadd.f32 %v72, %v73
    %v75 = vrot.slane %v74, 1
    %v76 = vadd.f32 %v74, %v75
    %77 = vst [vmem:[#allocation7] sm:$0x1] %v76
    // Predicated region
    $region18: #{tpu_custom_call.1} parent=1 // pred_check
      _
    $region19: #{tpu_custom_call.1} parent=1 // pred_check_branch
      %79 = sbr.rel (0) target = $region21
    $region20: #{tpu_custom_call.1} parent=1 // pred_region
      %s81 = ssub.s32 16, 16
      %82 = vsyncadd [#allocation4], %s81
      %s84 = sshll.u32 [#allocation7], 4
      %s85 = int_to_ptr.vmem [resolvable:$true] %s84
      %87 = dma.vmem_to_hbm [thread:$0]  %s85, 16, %s2, [#allocation4]
    $region21: #{tpu_custom_call.1} parent=1 // pred_fallthru
      _
    // Predicated region
    $region22: #{tpu_custom_call.1} parent=1 // pred_check
      _
    $region23: #{tpu_custom_call.1} parent=1 // pred_check_branch
      %89 = sbr.rel (0) target = $region25
    $region24: #{tpu_custom_call.1} parent=1 // pred_region
      %90 = dma.done [#allocation4], 16
    $region25: #{tpu_custom_call.1} parent=1 // pred_fallthru
      _
    %91 = vsyncpa [#allocation3], 1
    %92 = vsyncpa [#allocation6], 1
    %93 = vsyncpa [#allocation4], 1

</llo_original>
